<compile_context>
chip_gen: v7x
topology: tpu7x:2x2x1
jax: 0.10.0
libtpu: 0.0.40
codegen_flags: <defaults>
</compile_context>

<pallas_src>
import functools

import jax
import jax.numpy as jnp
import numpy as np
from jax.experimental import pallas as pl
from jax.experimental.pallas import tpu as pltpu

LANES = 128
PAIRS_PER_ROW = LANES // 2            # 64 particles per 128-lane row
DEFAULT_MAX_ROWS_PER_STEP = 8192      # 8192 rows * 128 lanes * 4 B = 4 MiB per block
MAX_BATCH_BLOCK = 8                   # static unroll bound inside the kernel
MIN_KERNEL_PARTICLES = 256            # below this, fused pure JAX wins


# ----------------------------- Pallas kernel ------------------------------- #
def _proposal_t_kernel(lat_ref, mix_ref, cst_ref, mu_ref):
    """lat_ref: (TB, TR, 128) interleaved (l0, l1) latent lane pairs.
    mix_ref: (128, 128) f32 block-diagonal kron(I_64, W_lat^T), resident.
    cst_ref: (TB, 1, 128) f32 per-batch obs/bias constants, interleaved (c0, c1).
    mu_ref : (TB, TR, 128) output, interleaved (mu0, mu1)."""
    mix = mix_ref[...]                                    # hoisted, 64 KiB resident
    for b in range(lat_ref.shape[0]):                     # static unroll, TB <= 8
        y = jnp.dot(lat_ref[b], mix, preferred_element_type=jnp.float32)
        mu_ref[b] = jnp.maximum(y + cst_ref[b], 0.0).astype(mu_ref.dtype)


# ------------------------------ tiling logic -------------------------------- #
def _tiling(B, R, max_rows):
    max_rows = max(8, (max_rows // 8) * 8)
    if R > max_rows:
        tile_r = max_rows                  # multiple of 8; ragged last block is masked
    else:
        tile_r = R                         # equals the full dim -> always legal
    tb = min(B, MAX_BATCH_BLOCK, max(1, max_rows // max(tile_r, 1)))
    # v7x has 2 TensorCores sharing HBM: avoid a degenerate single-step grid
    # when there is real work to split (e.g. B == 1, large P).
    if pl.cdiv(B, tb) * pl.cdiv(R, tile_r) == 1 and R >= 16:
        tile_r = ((pl.cdiv(R, 2) + 7) // 8) * 8
    return tb, tile_r


# ------------------------------ wrapper ------------------------------------ #
@functools.partial(jax.jit, static_argnames=("max_rows_per_step",))
def proposal_t_pallas(prev_latents, obs_prev, obs_t, wt, bt,
                      max_rows_per_step=DEFAULT_MAX_ROWS_PER_STEP):
    """prev_latents: (B, P, 2); obs_prev, obs_t: (B, 6); wt: (2, 14); bt: (2,)."""
    B, P, D = prev_latents.shape
    assert D == 2, "2-link arm model uses 2 latent dims"
    dtype = prev_latents.dtype

    # Per-batch obs/bias constant (f32).  Replaces expand_observation + concat,
    # i.e. the (B, P, 12) observation stream the PyTorch code pushes through HBM.
    wt32 = wt.astype(jnp.float32)
    cst = (obs_prev.astype(jnp.float32) @ wt32[:, 2:8].T
           + obs_t.astype(jnp.float32) @ wt32[:, 8:14].T
           + bt.astype(jnp.float32))                              # (B, 2)
    w_lat = wt32[:, :2]                                           # (2, 2)

    if P < MIN_KERNEL_PARTICLES:
        # Tiny per-batch work: XLA fuses this elementwise; a pallas_call here
        # would be pure launch overhead (review recommendation).
        loc = jax.nn.relu(prev_latents.astype(jnp.float32) @ w_lat.T
                          + cst[:, None, :])
        return loc.astype(dtype)

    # Free contiguous relayout (no transpose): (B, P, 2) -> (B, R, 128), each
    # 128-lane row holding 64 particles' interleaved (l0, l1) pairs.
    P_pad = -(-P // PAIRS_PER_ROW) * PAIRS_PER_ROW
    x = prev_latents
    if P_pad != P:
        # TODO(synk): a fully copy-free ragged-P path would need manual DMA of
        # the unaligned tail; only hit when P % 64 != 0 (pad <= 63 particles).
        x = jnp.pad(x, ((0, 0), (0, P_pad - P), (0, 0)))
    R = P_pad // PAIRS_PER_ROW
    x = x.reshape(B, R, LANES)

    # Pair-mixing matrix: maps interleaved [l0,l1,...] lanes -> [mu0,mu1,...].
    mix = jnp.kron(jnp.eye(PAIRS_PER_ROW, dtype=jnp.float32), w_lat.T)   # (128,128)
    cst_lane = jnp.tile(cst, (1, PAIRS_PER_ROW)).reshape(B, 1, LANES)    # f32

    tb, tile_r = _tiling(B, R, max_rows_per_step)
    grid = (pl.cdiv(B, tb), pl.cdiv(R, tile_r))

    elems = B * R * LANES
    cost = pl.CostEstimate(
        flops=2 * elems * LANES + 2 * elems,
        transcendentals=0,
        bytes_accessed=2 * elems * dtype.itemsize
        + mix.size * 4 + cst_lane.size * 4)

    mu = pl.pallas_call(
        _proposal_t_kernel,
        out_shape=jax.ShapeDtypeStruct((B, R, LANES), dtype),
        grid=grid,
        in_specs=[
            pl.BlockSpec((tb, tile_r, LANES), lambda i, j: (i, j, 0)),
            pl.BlockSpec((LANES, LANES), lambda i, j: (0, 0)),
            pl.BlockSpec((tb, 1, LANES), lambda i, j: (i, 0, 0)),
        ],
        out_specs=pl.BlockSpec((tb, tile_r, LANES), lambda i, j: (i, j, 0)),
        compiler_params=pltpu.CompilerParams(
            dimension_semantics=("parallel", "parallel"),
            vmem_limit_bytes=32 * 1024 * 1024),
        cost_estimate=cost,
    )(x, mix, cst_lane)

    mu = mu.reshape(B, P_pad, D)
    if P_pad != P:
        mu = mu[:, :P, :]     # only for P % 64 != 0; padded slots hold ReLU(cst)
    return mu


def proposal_forward(previous_latents=None, time=None, observations=None, *,
                     w0, b0, wt, bt, scale_0, scale_t,
                     max_rows_per_step=DEFAULT_MAX_ROWS_PER_STEP):
    """Mirrors Proposal.forward; returns the Normal's (loc, scale) parameters.

    # TODO(synk): torch.distributions.Normal + aesmc.state.set_batch_shape_mode
    # (BATCH_EXPANDED / FULLY_EXPANDED tagging) have no Pallas equivalent; the
    # Normal is represented by its (loc, scale) parameters.
    """
    if time == 0:
        # (B, 6) @ (6, 2): tiny — XLA fuses it; a kernel would be pure overhead.
        loc = jax.nn.relu(observations[0] @ w0.T + b0)
        return loc, scale_0
    prev = previous_latents[-1]
    loc = proposal_t_pallas(prev, observations[time - 1], observations[time],
                            wt, bt, max_rows_per_step=max_rows_per_step)
    return loc, scale_t


# ------------------------------ reference ---------------------------------- #
def _reference_t(prev, obs_prev, obs_t, wt, bt):
    B, P, D = prev.shape
    eop = np.broadcast_to(obs_prev[:, None, :], (B, P, obs_prev.shape[-1]))
    eo = np.broadcast_to(obs_t[:, None, :], (B, P, obs_t.shape[-1]))
    cat = np.concatenate([prev, eop, eo], axis=2).reshape(-1, D + 12)
    return np.maximum(cat @ wt.T + bt, 0.0).reshape(B, P, D)


def _reference_0(obs0, w0, b0):
    return np.maximum(obs0 @ w0.T + b0, 0.0)


# -------------------------------- demo -------------------------------------- #
if __name__ == "__main__":
    key = jax.random.PRNGKey(0)
    k = jax.random.split(key, 16)

    # Linear(14, 2) and Linear(6, 2) parameters (PyTorch-style uniform init).
    bt_bound = 1.0 / np.sqrt(14.0)
    wt = jax.random.uniform(k[0], (2, 14), jnp.float32, -bt_bound, bt_bound)
    bt = jax.random.uniform(k[1], (2,), jnp.float32, -bt_bound, bt_bound)
    b0_bound = 1.0 / np.sqrt(6.0)
    w0 = jax.random.uniform(k[2], (2, 6), jnp.float32, -b0_bound, b0_bound)
    b0 = jax.random.uniform(k[3], (2,), jnp.float32, -b0_bound, b0_bound)
    scale_0, scale_t = 0.2, 0.1

    # ---- time == 0 branch (pure JAX — tiny) ----
    B0 = 2
    obs0 = [jax.random.normal(k[4], (B0, 6), jnp.float32)]
    loc0, s0 = proposal_forward(time=0, observations=obs0, w0=w0, b0=b0,
                                wt=wt, bt=bt, scale_0=scale_0, scale_t=scale_t)
    np.testing.assert_allclose(
        np.asarray(loc0),
        _reference_0(np.asarray(obs0[0], np.float64),
                     np.asarray(w0, np.float64), np.asarray(b0, np.float64)),
        rtol=1e-5, atol=1e-5)
    assert loc0.shape == (B0, 2) and s0 == scale_0

    # ---- time >= 1 branch ----
    # (B, P, max_rows_per_step): exercises aligned P (zero-copy), ragged P
    # (pad/slice path), ragged row grid (masked last block), multi-batch blocks
    # with a ragged batch block, the degenerate-grid split for B==1, and the
    # small-P pure-JAX fallback.
    cases = [
        (2, 512, DEFAULT_MAX_ROWS_PER_STEP),   # aligned, single full block
        (2, 500, DEFAULT_MAX_ROWS_PER_STEP),   # P % 64 != 0 -> pad/slice path
        (4, 640, 8),                           # R=10 > 8 -> ragged row blocks
        (5, 512, 32),                          # TB=4 batch blocks, ragged batch tail
        (1, 2048, DEFAULT_MAX_ROWS_PER_STEP),  # B=1 -> grid split for 2 TCs
        (3, 100, DEFAULT_MAX_ROWS_PER_STEP),   # tiny P -> fused pure-JAX fallback
    ]
    ki = 5
    for B, P, max_rows in cases:
        kk = jax.random.split(k[ki], 4)
        ki += 1
        prev = 0.5 * jax.random.normal(kk[0], (B, P, 2), jnp.float32)
        observations = [jax.random.normal(kk[1], (B, 6), jnp.float32),
                        jax.random.normal(kk[2], (B, 6), jnp.float32),
                        jax.random.normal(kk[3], (B, 6), jnp.float32)]
        loc_t, s_t = proposal_forward(previous_latents=[prev], time=2,
                                      observations=observations,
                                      w0=w0, b0=b0, wt=wt, bt=bt,
                                      scale_0=scale_0, scale_t=scale_t,
                                      max_rows_per_step=max_rows)
        jax.block_until_ready(loc_t)
        ref_t = _reference_t(np.asarray(prev, np.float64),
                             np.asarray(observations[1], np.float64),
                             np.asarray(observations[2], np.float64),
                             np.asarray(wt, np.float64),
                             np.asarray(bt, np.float64))
        np.testing.assert_allclose(np.asarray(loc_t), ref_t,
                                   rtol=1e-4, atol=1e-5)
        assert loc_t.shape == (B, P, 2) and s_t == scale_t

    print("KERNEL_OK")
</pallas_src>

<mosaic_0001>
module attributes {stable_mosaic.version = 11 : i64} {
  func.func @_proposal_t_kernel(%arg0: i32, %arg1: i32, %arg2: memref<2x8x128xf32, #tpu.memory_space<vmem>>, %arg3: memref<128x128xf32, #tpu.memory_space<vmem>>, %arg4: memref<2x1x128xf32, #tpu.memory_space<vmem>>, %arg5: memref<2x8x128xf32, #tpu.memory_space<vmem>>) attributes {dimension_semantics = [#tpu.dimension_semantics<parallel>, #tpu.dimension_semantics<parallel>], iteration_bounds = array<i64: 1, 1>, scalar_prefetch = 0 : i64, scratch_operands = 0 : i64, tpu.core_type = #tpu.core_type<tc>, window_params = [{transform_indices = @transform_0, window_bounds = array<i64: 2, 8, 128>}, {pipeline_mode = #tpu.pipeline_mode<synchronous>, transform_indices = @transform_1, window_bounds = array<i64: 128, 128>}, {transform_indices = @transform_2, window_bounds = array<i64: 2, 1, 128>}, {transform_indices = @transform_3, window_bounds = array<i64: 2, 8, 128>}]} {
    %c0 = arith.constant 0 : index
    %c0_0 = arith.constant 0 : index
    %0 = vector.load %arg3[%c0, %c0_0] : memref<128x128xf32, #tpu.memory_space<vmem>>, vector<128x128xf32>
    %c0_1 = arith.constant 0 : index
    %c0_2 = arith.constant 0 : index
    %c0_3 = arith.constant 0 : index
    %1 = vector.load %arg2[%c0_1, %c0_2, %c0_3] : memref<2x8x128xf32, #tpu.memory_space<vmem>>, vector<1x8x128xf32>
    %2 = vector.shape_cast %1 : vector<1x8x128xf32> to vector<8x128xf32>
    %cst = arith.constant dense<0.000000e+00> : vector<8x128xf32>
    %3 = tpu.matmul %2, %0, %cst {dimension_numbers = #tpu.dot_dimension_numbers<[1], [0], [0], [1], [0, 0, 1, 1], [], []>} : vector<8x128xf32>, vector<128x128xf32>, vector<8x128xf32> -> vector<8x128xf32>
    %c0_4 = arith.constant 0 : index
    %c0_5 = arith.constant 0 : index
    %c0_6 = arith.constant 0 : index
    %4 = vector.load %arg4[%c0_4, %c0_5, %c0_6] : memref<2x1x128xf32, #tpu.memory_space<vmem>>, vector<1x1x128xf32>
    %5 = vector.shape_cast %4 : vector<1x1x128xf32> to vector<1x128xf32>
    %6 = vector.broadcast %5 : vector<1x128xf32> to vector<8x128xf32>
    %7 = arith.addf %3, %6 : vector<8x128xf32>
    %cst_7 = arith.constant 0.000000e+00 : f32
    %8 = vector.broadcast %cst_7 : f32 to vector<8x128xf32>
    %9 = arith.maximumf %7, %8 : vector<8x128xf32>
    %c0_8 = arith.constant 0 : index
    %c0_9 = arith.constant 0 : index
    %c0_10 = arith.constant 0 : index
    %10 = vector.load %arg5[%c0_8, %c0_9, %c0_10] : memref<2x8x128xf32, #tpu.memory_space<vmem>>, vector<1x8x128xf32>
    %11 = vector.shape_cast %10 : vector<1x8x128xf32> to vector<8x128xf32>
    %12 = vector.shape_cast %9 : vector<8x128xf32> to vector<1x8x128xf32>
    tpu.vector_store %arg5[%c0_8, %c0_9, %c0_10], %12 {strides = array<i32>} : memref<2x8x128xf32, #tpu.memory_space<vmem>>, vector<1x8x128xf32>,
    %c1 = arith.constant 1 : index
    %c0_11 = arith.constant 0 : index
    %c0_12 = arith.constant 0 : index
    %13 = vector.load %arg2[%c1, %c0_11, %c0_12] : memref<2x8x128xf32, #tpu.memory_space<vmem>>, vector<1x8x128xf32>
    %14 = vector.shape_cast %13 : vector<1x8x128xf32> to vector<8x128xf32>
    %cst_13 = arith.constant dense<0.000000e+00> : vector<8x128xf32>
    %15 = tpu.matmul %14, %0, %cst_13 {dimension_numbers = #tpu.dot_dimension_numbers<[1], [0], [0], [1], [0, 0, 1, 1], [], []>} : vector<8x128xf32>, vector<128x128xf32>, vector<8x128xf32> -> vector<8x128xf32>
    %c1_14 = arith.constant 1 : index
    %c0_15 = arith.constant 0 : index
    %c0_16 = arith.constant 0 : index
    %16 = vector.load %arg4[%c1_14, %c0_15, %c0_16] : memref<2x1x128xf32, #tpu.memory_space<vmem>>, vector<1x1x128xf32>
    %17 = vector.shape_cast %16 : vector<1x1x128xf32> to vector<1x128xf32>
    %18 = vector.broadcast %17 : vector<1x128xf32> to vector<8x128xf32>
    %19 = arith.addf %15, %18 : vector<8x128xf32>
    %cst_17 = arith.constant 0.000000e+00 : f32
    %20 = vector.broadcast %cst_17 : f32 to vector<8x128xf32>
    %21 = arith.maximumf %19, %20 : vector<8x128xf32>
    %c1_18 = arith.constant 1 : index
    %c0_19 = arith.constant 0 : index
    %c0_20 = arith.constant 0 : index
    %22 = vector.load %arg5[%c1_18, %c0_19, %c0_20] : memref<2x8x128xf32, #tpu.memory_space<vmem>>, vector<1x8x128xf32>
    %23 = vector.shape_cast %22 : vector<1x8x128xf32> to vector<8x128xf32>
    %24 = vector.shape_cast %21 : vector<8x128xf32> to vector<1x8x128xf32>
    tpu.vector_store %arg5[%c1_18, %c0_19, %c0_20], %24 {strides = array<i32>} : memref<2x8x128xf32, #tpu.memory_space<vmem>>, vector<1x8x128xf32>,
    return
  }
  func.func @transform_0(%arg0: i32, %arg1: i32) -> (i32, i32, i32) {
    %c0_i32 = arith.constant 0 : i32
    %c0_i32_0 = arith.constant 0 : i32
    return %arg0, %arg1, %c0_i32 : i32, i32, i32
  }
  func.func @transform_1(%arg0: i32, %arg1: i32) -> (i32, i32) {
    %c0_i32 = arith.constant 0 : i32
    %c0_i32_0 = arith.constant 0 : i32
    %c0_i32_1 = arith.constant 0 : i32
    return %c0_i32, %c0_i32_0 : i32, i32
  }
  func.func @transform_2(%arg0: i32, %arg1: i32) -> (i32, i32, i32) {
    %c0_i32 = arith.constant 0 : i32
    %c0_i32_0 = arith.constant 0 : i32
    %c0_i32_1 = arith.constant 0 : i32
    return %arg0, %c0_i32, %c0_i32_0 : i32, i32, i32
  }
  func.func @transform_3(%arg0: i32, %arg1: i32) -> (i32, i32, i32) {
    %c0_i32 = arith.constant 0 : i32
    %c0_i32_0 = arith.constant 0 : i32
    return %arg0, %arg1, %c0_i32 : i32, i32, i32
  }
}

</mosaic_0001>

<llo_original>
// kernel: proposal_t_pallas.1
$region0: #{proposal_t_pallas.1}
  #allocation0 [shape = 'u32[]', space=smem, size = 0x4, offset = 0x4, fixed_abs, tag = 'smem constant byte address 0x4 - core index']
  #allocation1 [shape = 'u32[144,128]{1,0:T(1,128)}', space=vmem, size = 0x12000, scoped, tag = 'internal scratch']
  %s0 = inlined_call_operand.vmem [shape: f32[2,8,128], index: 0, kind: input, shape index: {}]
  %s1 = inlined_call_operand.vmem [shape: f32[128,128], index: 1, kind: input, shape index: {}]
  %s2 = inlined_call_operand.vmem [shape: f32[2,1,128], index: 2, kind: input, shape index: {}]
  %s3 = inlined_call_operand.vmem [shape: f32[2,8,128], index: 3, kind: output, shape index: {}]
  %s4 = sld [smem:[#allocation0]]
  $region22: #{proposal_t_pallas.1} parent=0
    _
  %s6 = ssub.s32 1, %s4
  %s7 = scalar_select 0, %s6, %s4
  // Predicated region
  $region2: #{proposal_t_pallas.1} parent=0 // pred_check
    _
  $region3: #{proposal_t_pallas.1} parent=0 // pred_check_branch
    %9 = sbr.rel (0) target = $region5
  $region4: #{proposal_t_pallas.1} parent=0 // pred_region
    _
  $region5: #{proposal_t_pallas.1} parent=0 // pred_fallthru
    _
  // Predicated region
  $region6: #{proposal_t_pallas.1} parent=0 // pred_check
    _
  $region7: #{proposal_t_pallas.1} parent=0 // pred_check_branch
    %11 = sbr.rel (0) target = $region9
  $region8: #{proposal_t_pallas.1} parent=0 // pred_region
    _
  $region9: #{proposal_t_pallas.1} parent=0 // pred_fallthru
    _
  // Predicated region
  $region10: #{proposal_t_pallas.1} parent=0 // pred_check
    _
  $region11: #{proposal_t_pallas.1} parent=0 // pred_check_branch
    %13 = sbr.rel (0) target = $region13
  $region12: #{proposal_t_pallas.1} parent=0 // pred_region
    _
  $region13: #{proposal_t_pallas.1} parent=0 // pred_fallthru
    _
  %v14 = vld [vmem:[%s1] sm:$0xff]
  %v15 = vld [vmem:[%s1 + $0x8] sm:$0xff]
  %v16 = vld [vmem:[%s1 + $0x10] sm:$0xff]
  %v17 = vld [vmem:[%s1 + $0x18] sm:$0xff]
  %v18 = vld [vmem:[%s1 + $0x20] sm:$0xff]
  %v19 = vld [vmem:[%s1 + $0x28] sm:$0xff]
  %v20 = vld [vmem:[%s1 + $0x30] sm:$0xff]
  %v21 = vld [vmem:[%s1 + $0x38] sm:$0xff]
  %v22 = vld [vmem:[%s1 + $0x40] sm:$0xff]
  %v23 = vld [vmem:[%s1 + $0x48] sm:$0xff]
  %v24 = vld [vmem:[%s1 + $0x50] sm:$0xff]
  %v25 = vld [vmem:[%s1 + $0x58] sm:$0xff]
  %v26 = vld [vmem:[%s1 + $0x60] sm:$0xff]
  %v27 = vld [vmem:[%s1 + $0x68] sm:$0xff]
  %v28 = vld [vmem:[%s1 + $0x70] sm:$0xff]
  %v29 = vld [vmem:[%s1 + $0x78] sm:$0xff]
  %v30 = vld [vmem:[%s0] sm:$0xff]
  %v31 = vld [vmem:[%s2] sm:$0x1]
  %v33 = vlaneseq
  %v34 = vshrl.u32 %v33, 7
  %v35 = vsub.s32 0, %v34
  %v36 = vrot.slane %v31, %v35
  %38 = vmatprep.subr.mxu0 0.0
  %39 = vmatpush1.msra.mxu0 %v14
  %40 = vmatprep.subr.mxu0 0.0
  %41 = vmatpush1.msra.mxu0 %v15
  %42 = vmatprep.subr.mxu0 0.0
  %43 = vmatpush1.msra.mxu0 %v16
  %44 = vmatprep.subr.mxu0 0.0
  %45 = vmatpush1.msra.mxu0 %v17
  %46 = vmatprep.subr.mxu0 0.0
  %47 = vmatpush1.msra.mxu0 %v18
  %48 = vmatprep.subr.mxu0 0.0
  %49 = vmatpush1.msra.mxu0 %v19
  %50 = vmatprep.subr.mxu0 0.0
  %51 = vmatpush1.msra.mxu0 %v20
  %52 = vmatprep.subr.mxu0 0.0
  %53 = vmatpush1.msra.mxu0 %v21
  %54 = vmatprep.subr.mxu0 0.0
  %55 = vmatpush1.msra.mxu0 %v22
  %56 = vmatprep.subr.mxu0 0.0
  %57 = vmatpush1.msra.mxu0 %v23
  %58 = vmatprep.subr.mxu0 0.0
  %59 = vmatpush1.msra.mxu0 %v24
  %60 = vmatprep.subr.mxu0 0.0
  %61 = vmatpush1.msra.mxu0 %v25
  %62 = vmatprep.subr.mxu0 0.0
  %63 = vmatpush1.msra.mxu0 %v26
  %64 = vmatprep.subr.mxu0 0.0
  %65 = vmatpush1.msra.mxu0 %v27
  %66 = vmatprep.subr.mxu0 0.0
  %67 = vmatpush1.msra.mxu0 %v28
  %68 = vmatprep.subr.mxu0 0.0
  %69 = vmatpush1.msra.mxu0 %v29
  %70 = vmatprep.subr.mxu0 0.0
  %71 = vmatpush1.msra.mxu0 0.0
  %72 = vmatprep.subr.mxu0 0.0
  %73 = vmatpush1.msra.mxu0 0.0
  %74 = vmatprep.subr.mxu0 0.0
  %75 = vmatpush1.msra.mxu0 0.0
  %76 = vmatprep.subr.mxu0 0.0
  %77 = vmatpush1.msra.mxu0 0.0
  %78 = vmatprep.subr.mxu0 0.0
  %79 = vmatpush1.msra.mxu0 0.0
  %80 = vmatprep.subr.mxu0 0.0
  %81 = vmatpush1.msra.mxu0 0.0
  %82 = vmatprep.subr.mxu0 0.0
  %83 = vmatpush1.msra.mxu0 0.0
  %84 = vmatprep.subr.mxu0 0.0
  %85 = vmatpush1.msra.mxu0 0.0
  %86 = vmatprep.subr.mxu0 0.0
  %87 = vmatpush1.msra.mxu0 0.0
  %88 = vmatprep.subr.mxu0 0.0
  %89 = vmatpush1.msra.mxu0 0.0
  %90 = vmatprep.subr.mxu0 0.0
  %91 = vmatpush1.msra.mxu0 0.0
  %92 = vmatprep.subr.mxu0 0.0
  %93 = vmatpush1.msra.mxu0 0.0
  %94 = vmatprep.subr.mxu0 0.0
  %95 = vmatpush1.msra.mxu0 0.0
  %96 = vmatprep.subr.mxu0 0.0
  %97 = vmatpush1.msra.mxu0 0.0
  %98 = vmatprep.subr.mxu0 0.0
  %99 = vmatpush1.msra.mxu0 0.0
  %100 = vmatprep.subr.mxu0 0.0
  %101 = vmatpush1.msra.mxu0 0.0
  %102 = vmatprep.mubr.f32.mxu0 0.0
  %103 = vmatmul.mubr.f32.gmra.mrb[0].mxu0 %v30
  %v104 = vpop.f32.mrb[0].mxu0
  %v105 = vadd.f32 %v36, %v104
  %v106 = vpop.f32.mrb[0].mxu0
  %107 = vdwg.mxu0
  %v108 = vmax.f32 %v105, 0.0
  %109 = vst [vmem:[%s3] sm:$0xff] %v108
  %s110 = scalar_lea.vmem %s0, 8
  %v111 = vld [vmem:[%s110] sm:$0xff]
  %s112 = scalar_lea.vmem %s2, 1
  %v113 = vld [vmem:[%s112] sm:$0x1]
  %v115 = vlaneseq
  %v116 = vshrl.u32 %v115, 7
  %v117 = vsub.s32 0, %v116
  %v118 = vrot.slane %v113, %v117
  %120 = vmatprep.subr.mxu0 0.0
  %121 = vmatpush1.msra.mxu0 %v14
  %122 = vmatprep.subr.mxu0 0.0
  %123 = vmatpush1.msra.mxu0 %v15
  %124 = vmatprep.subr.mxu0 0.0
  %125 = vmatpush1.msra.mxu0 %v16
  %126 = vmatprep.subr.mxu0 0.0
  %127 = vmatpush1.msra.mxu0 %v17
  %128 = vmatprep.subr.mxu0 0.0
  %129 = vmatpush1.msra.mxu0 %v18
  %130 = vmatprep.subr.mxu0 0.0
  %131 = vmatpush1.msra.mxu0 %v19
  %132 = vmatprep.subr.mxu0 0.0
  %133 = vmatpush1.msra.mxu0 %v20
  %134 = vmatprep.subr.mxu0 0.0
  %135 = vmatpush1.msra.mxu0 %v21
  %136 = vmatprep.subr.mxu0 0.0
  %137 = vmatpush1.msra.mxu0 %v22
  %138 = vmatprep.subr.mxu0 0.0
  %139 = vmatpush1.msra.mxu0 %v23
  %140 = vmatprep.subr.mxu0 0.0
  %141 = vmatpush1.msra.mxu0 %v24
  %142 = vmatprep.subr.mxu0 0.0
  %143 = vmatpush1.msra.mxu0 %v25
  %144 = vmatprep.subr.mxu0 0.0
  %145 = vmatpush1.msra.mxu0 %v26
  %146 = vmatprep.subr.mxu0 0.0
  %147 = vmatpush1.msra.mxu0 %v27
  %148 = vmatprep.subr.mxu0 0.0
  %149 = vmatpush1.msra.mxu0 %v28
  %150 = vmatprep.subr.mxu0 0.0
  %151 = vmatpush1.msra.mxu0 %v29
  %152 = vmatprep.subr.mxu0 0.0
  %153 = vmatpush1.msra.mxu0 0.0
  %154 = vmatprep.subr.mxu0 0.0
  %155 = vmatpush1.msra.mxu0 0.0
  %156 = vmatprep.subr.mxu0 0.0
  %157 = vmatpush1.msra.mxu0 0.0
  %158 = vmatprep.subr.mxu0 0.0
  %159 = vmatpush1.msra.mxu0 0.0
  %160 = vmatprep.subr.mxu0 0.0
  %161 = vmatpush1.msra.mxu0 0.0
  %162 = vmatprep.subr.mxu0 0.0
  %163 = vmatpush1.msra.mxu0 0.0
  %164 = vmatprep.subr.mxu0 0.0
  %165 = vmatpush1.msra.mxu0 0.0
  %166 = vmatprep.subr.mxu0 0.0
  %167 = vmatpush1.msra.mxu0 0.0
  %168 = vmatprep.subr.mxu0 0.0
  %169 = vmatpush1.msra.mxu0 0.0
  %170 = vmatprep.subr.mxu0 0.0
  %171 = vmatpush1.msra.mxu0 0.0
  %172 = vmatprep.subr.mxu0 0.0
  %173 = vmatpush1.msra.mxu0 0.0
  %174 = vmatprep.subr.mxu0 0.0
  %175 = vmatpush1.msra.mxu0 0.0
  %176 = vmatprep.subr.mxu0 0.0
  %177 = vmatpush1.msra.mxu0 0.0
  %178 = vmatprep.subr.mxu0 0.0
  %179 = vmatpush1.msra.mxu0 0.0
  %180 = vmatprep.subr.mxu0 0.0
  %181 = vmatpush1.msra.mxu0 0.0
  %182 = vmatprep.subr.mxu0 0.0
  %183 = vmatpush1.msra.mxu0 0.0
  %184 = vmatprep.mubr.f32.mxu0 0.0
  %185 = vmatmul.mubr.f32.gmra.mrb[0].mxu0 %v111
  %v186 = vpop.f32.mrb[0].mxu0
  %v187 = vadd.f32 %v118, %v186
  %v188 = vpop.f32.mrb[0].mxu0
  %189 = vdwg.mxu0
  %v190 = vmax.f32 %v187, 0.0
  %s191 = scalar_lea.vmem %s3, 8
  %192 = vst [vmem:[%s191] sm:$0xff] %v190
  // Predicated region
  $region14: #{proposal_t_pallas.1} parent=0 // pred_check
    _
  $region15: #{proposal_t_pallas.1} parent=0 // pred_check_branch
    %194 = sbr.rel (0) target = $region17
  $region16: #{proposal_t_pallas.1} parent=0 // pred_region
    _
  $region17: #{proposal_t_pallas.1} parent=0 // pred_fallthru
    _
  // Predicated region
  $region18: #{proposal_t_pallas.1} parent=0 // pred_check
    _
  $region19: #{proposal_t_pallas.1} parent=0 // pred_check_branch
    %196 = sbr.rel (0) target = $region21
  $region20: #{proposal_t_pallas.1} parent=0 // pred_region
    _
  $region21: #{proposal_t_pallas.1} parent=0 // pred_fallthru
    _

</llo_original>
